<compile_context>
chip_gen: v7x
topology: tpu7x:2x2x1
jax: 0.10.0
libtpu: 0.0.40
codegen_flags: <defaults>
</compile_context>

<pallas_src>
import math

import numpy as np
import jax
import jax.numpy as jnp
from jax.experimental import pallas as pl
from jax.experimental.pallas import tpu as pltpu

# ---- hyper-parameters (match ArcNegFace.__init__ defaults) -------------
SCALE = 64.0
MARGIN = 0.5
ALPHA = 1.2
SIGMA = 2.0
THRESH = math.cos(math.pi - MARGIN)
MM = math.sin(math.pi - MARGIN) * MARGIN
COS_M = math.cos(MARGIN)
SIN_M = math.sin(MARGIN)

_EPS = 1e-12  # guards zero-norm rows (padded rows / degenerate data)


def _round_up(n, m):
    return ((n + m - 1) // m) * m


# ------------------------------------------------------------------------
# Kernel 1: column-wise L2 normalization of the pre-transposed weight
# (D, Cp), emitted as bf16.  Columns of W^T == rows of W, so this equals the
# PyTorch row-normalization; the (D, TC) output layout is the native (K, N)
# MXU operand for the main matmul (no per-step transpose possible).
# ------------------------------------------------------------------------
def _norm_cols_kernel(wt_ref, out_ref):
    w = wt_ref[...]                                            # (D, TC) f32
    inv = jax.lax.rsqrt(jnp.sum(w * w, axis=0, keepdims=True) + _EPS)
    out_ref[...] = (w * inv).astype(out_ref.dtype)             # bf16


# ------------------------------------------------------------------------
# Kernel 2 (prologue): normalize x (bf16 out for the MXU), and compute the
# margined target cosine a_t per row from the gathered target weight rows,
# all in f32.
# ------------------------------------------------------------------------
def _prologue_kernel(x_ref, wlab_ref, exb_ref, a_t_ref):
    x = x_ref[...]                                             # (TB, D) f32
    ex = x * jax.lax.rsqrt(jnp.sum(x * x, axis=1, keepdims=True) + _EPS)
    exb_ref[...] = ex.astype(exb_ref.dtype)                    # bf16

    wl = wlab_ref[...]                                         # (TB, D) f32
    ewl = wl * jax.lax.rsqrt(jnp.sum(wl * wl, axis=1, keepdims=True) + _EPS)

    cos_t = jnp.sum(ex * ewl, axis=1, keepdims=True)           # (TB, 1) f32
    # cos(acos(c) + m) = c*cos(m) - sqrt(1 - c^2)*sin(m)
    sin_t = jnp.sqrt(jnp.maximum(1.0 - cos_t * cos_t, 0.0))
    cos_phi = cos_t * COS_M - sin_t * SIN_M
    a_t_ref[...] = jnp.where(cos_t > THRESH, cos_phi, cos_t - MM)


# ------------------------------------------------------------------------
# Kernel 3 (main): grid (C tiles outer, B tiles inner).  exb / labels / a_t
# are VMEM-resident (constant block index) and sliced per B tile; the
# (D, TC) weight tile is fetched once per C tile.  bf16 MXU matmul with f32
# accumulation + folded-constant f32 epilogue.
# ------------------------------------------------------------------------
def _arcneg_main_kernel(exb_ref, ewt_ref, lab_ref, a_t_ref, o_ref):
    TB, TC = o_ref.shape
    row0 = pl.multiple_of(pl.program_id(1) * TB, TB)
    rows = pl.ds(row0, TB)

    # (TB, D) x (D, TC) -> (TB, TC), f32 accumulation on the MXU.
    cos = jax.lax.dot_general(
        exb_ref[rows, :], ewt_ref[...],
        dimension_numbers=(((1,), (0,)), ((), ())),
        preferred_element_type=jnp.float32)

    a_t = a_t_ref[rows, :]                                     # (TB, 1) f32
    lab = lab_ref[rows, :]                                     # (TB, 1) i32

    # Per-row subtract instead of per-element add (cheaper on VALU).
    lab_local = lab - pl.program_id(0) * TC                    # (TB, 1)
    is_tgt = jax.lax.broadcasted_iota(jnp.int32, (TB, TC), 1) == lab_local

    diff = cos - a_t
    t_ss = (SCALE * ALPHA) * jnp.exp(diff * diff * (-1.0 / SIGMA))  # EUP exp
    out_neg = t_ss * (cos + 1.0) - SCALE
    # TODO(synk): on v7x (VALU-bound epilogue) the target select could move to
    # a tiny aliased patch kernel; kept in-kernel here to avoid an extra full
    # HBM pass over the (B, C) output on v5e/v6e.
    o_ref[...] = jnp.where(is_tgt, SCALE * a_t, out_neg).astype(o_ref.dtype)


# ------------------------------------------------------------------------
# Wrapper
# ------------------------------------------------------------------------
def arcnegface(x, weight, label, *, tb=256, tc=512, out_dtype=jnp.float32):
    """x: (B, D) f32, weight: (C, D) f32, label: (B,) int -> (B, C) logits."""
    x = x.astype(jnp.float32)
    weight = weight.astype(jnp.float32)
    label = label.astype(jnp.int32)

    B, D = x.shape
    C, _ = weight.shape

    # Tile sizes: lane-dense output (TC multiple of 128); TB multiple of 16 so
    # dynamic sublane slices of the packed bf16 resident exb stay aligned.
    TB = tb if B >= tb else _round_up(B, 16)
    TC = tc if C >= tc else _round_up(C, 128)
    Bp = _round_up(B, TB)
    Cp = _round_up(C, TC)

    xp = x if Bp == B else jnp.pad(x, ((0, Bp - B), (0, 0)))
    wp = weight if Cp == C else jnp.pad(weight, ((0, Cp - C), (0, 0)))
    labp = label if Bp == B else jnp.pad(label, (0, Bp - B))
    lab2d = labp.reshape(Bp, 1)

    # One-time layout plumbing: (Cp, D) -> (D, Cp) so the normalized weight is
    # emitted directly in the native MXU (K, N) orientation.
    wtp = wp.T

    # ---- normalize weight once, pre-transposed, bf16 output ----
    ewt = pl.pallas_call(
        _norm_cols_kernel,
        out_shape=jax.ShapeDtypeStruct((D, Cp), jnp.bfloat16),
        grid=(Cp // TC,),
        in_specs=[pl.BlockSpec((D, TC), lambda i: (0, i))],
        out_specs=pl.BlockSpec((D, TC), lambda i: (0, i)),
        compiler_params=pltpu.CompilerParams(
            dimension_semantics=("parallel",)),
    )(wtp)

    # ---- gather the B target weight rows (O(B*D), done in the wrapper) ----
    # Out-of-range labels are clipped (PyTorch would raise on them).
    w_lab = jnp.take(weight, jnp.clip(label, 0, C - 1), axis=0)
    w_lab_p = w_lab if Bp == B else jnp.pad(w_lab, ((0, Bp - B), (0, 0)))

    # ---- prologue: normalized x (bf16) + per-row a_t (f32) ----
    exb, a_t = pl.pallas_call(
        _prologue_kernel,
        out_shape=(jax.ShapeDtypeStruct((Bp, D), jnp.bfloat16),
                   jax.ShapeDtypeStruct((Bp, 1), jnp.float32)),
        grid=(Bp // TB,),
        in_specs=[pl.BlockSpec((TB, D), lambda i: (i, 0)),
                  pl.BlockSpec((TB, D), lambda i: (i, 0))],
        out_specs=(pl.BlockSpec((TB, D), lambda i: (i, 0)),
                   pl.BlockSpec((TB, 1), lambda i: (i, 0))),
        compiler_params=pltpu.CompilerParams(
            dimension_semantics=("parallel",)),
    )(xp, w_lab_p)

    # ---- main tiled kernel ----
    nC, nB = Cp // TC, Bp // TB
    out_itemsize = np.dtype(out_dtype).itemsize
    cost = pl.CostEstimate(
        flops=2 * Bp * Cp * D,
        transcendentals=Bp * Cp,
        bytes_accessed=(2 * Bp * D + 2 * Cp * D
                        + out_itemsize * Bp * Cp + 8 * Bp),
    )
    # VMEM budget: resident exb/lab/a_t (worst-case double-buffered) +
    # double-buffered ewt and output tiles + slack.
    vmem_needed = (2 * Bp * D * 2 + 2 * D * TC * 2 + 2 * TB * TC * 4
                   + 2 * Bp * 8 + (2 << 20))
    vmem_limit = int(min(max(vmem_needed, 32 << 20), 64 << 20))

    out = pl.pallas_call(
        _arcneg_main_kernel,
        out_shape=jax.ShapeDtypeStruct((Bp, Cp), out_dtype),
        grid=(nC, nB),
        in_specs=[pl.BlockSpec((Bp, D), lambda c, b: (0, 0)),   # exb, resident
                  pl.BlockSpec((D, TC), lambda c, b: (0, c)),   # ewt, per C tile
                  pl.BlockSpec((Bp, 1), lambda c, b: (0, 0)),   # labels, resident
                  pl.BlockSpec((Bp, 1), lambda c, b: (0, 0))],  # a_t, resident
        out_specs=pl.BlockSpec((TB, TC), lambda c, b: (b, c)),
        compiler_params=pltpu.CompilerParams(
            dimension_semantics=("parallel", "parallel"),
            vmem_limit_bytes=vmem_limit),
        cost_estimate=cost,
    )(exb, ewt, lab2d, a_t)

    if Bp != B or Cp != C:
        out = out[:B, :C]
    return out


# ------------------------------------------------------------------------
# Pure-JAX reference mirroring the PyTorch forward (non-easy-margin).
# matmul_dtype=f32 -> exact PyTorch semantics; bf16 -> mirrors the kernel.
# ------------------------------------------------------------------------
def arcnegface_ref(x, weight, label, matmul_dtype=jnp.float32):
    ex = x / jnp.linalg.norm(x, axis=1, keepdims=True)
    ew = weight / jnp.linalg.norm(weight, axis=1, keepdims=True)
    cos = jnp.dot(ex.astype(matmul_dtype), ew.astype(matmul_dtype).T,
                  preferred_element_type=jnp.float32,
                  precision=jax.lax.Precision.HIGHEST)
    C = weight.shape[0]
    onehot = jax.nn.one_hot(label, C, dtype=jnp.float32)
    cos_t = jnp.sum(ex * ew[label], axis=1, keepdims=True)      # full f32
    a_t = jnp.where(
        cos_t > THRESH,
        jnp.cos(jnp.arccos(jnp.clip(cos_t, -1.0, 1.0)) + MARGIN),
        cos_t - MM,
    )
    t_scale = ALPHA * jnp.exp(-((cos - a_t) ** 2) / SIGMA)
    return SCALE * (onehot * a_t + (1.0 - onehot) * (t_scale * cos + t_scale - 1.0))


if __name__ == "__main__":
    B, D, C = 8, 64, 128  # batch, in_features, out_features (small demo shapes)

    key = jax.random.PRNGKey(0)
    kx, kw, kl = jax.random.split(key, 3)

    x = jax.random.normal(kx, (B, D), dtype=jnp.float32)
    stdv = 1.0 / math.sqrt(D)  # PyTorch reset_parameters: uniform(-stdv, stdv)
    weight = jax.random.uniform(kw, (C, D), dtype=jnp.float32,
                                minval=-stdv, maxval=stdv)
    label = jax.random.randint(kl, (B,), 0, C, dtype=jnp.int32)

    out = jax.block_until_ready(arcnegface(x, weight, label))
    assert out.shape == (B, C)

    # Tight check vs a reference using the same bf16-matmul precision.
    ref_bf16 = arcnegface_ref(x, weight, label, matmul_dtype=jnp.bfloat16)
    assert jnp.allclose(out, ref_bf16, atol=2e-2, rtol=1e-2), \
        "mismatch vs bf16-matmul reference"

    # Loose sanity check vs the exact f32 PyTorch-semantics reference
    # (bf16 MXU inputs perturb non-target cosines by ~1e-3).
    ref_f32 = arcnegface_ref(x, weight, label, matmul_dtype=jnp.float32)
    assert jnp.allclose(out, ref_f32, atol=5e-1, rtol=5e-2), \
        "mismatch vs f32 reference"

    # TODO(synk): easy_margin=True branch of the PyTorch module is not
    # implemented (module default is easy_margin=False).
    print("KERNEL_OK")
</pallas_src>

<mosaic_0001>
module attributes {stable_mosaic.version = 11 : i64} {
  func.func @_norm_cols_kernel(%arg0: i32, %arg1: memref<64x128xf32, #tpu.memory_space<vmem>>, %arg2: memref<64x128xbf16, #tpu.memory_space<vmem>>) attributes {dimension_semantics = [#tpu.dimension_semantics<parallel>], iteration_bounds = array<i64: 1>, scalar_prefetch = 0 : i64, scratch_operands = 0 : i64, tpu.core_type = #tpu.core_type<tc>, window_params = [{transform_indices = @transform_0, window_bounds = array<i64: 64, 128>}, {transform_indices = @transform_1, window_bounds = array<i64: 64, 128>}]} {
    %c0 = arith.constant 0 : index
    %c0_0 = arith.constant 0 : index
    %0 = vector.load %arg1[%c0, %c0_0] : memref<64x128xf32, #tpu.memory_space<vmem>>, vector<64x128xf32>
    %1 = arith.mulf %0, %0 : vector<64x128xf32>
    %cst = arith.constant dense<0.000000e+00> : vector<128xf32>
    %2 = vector.multi_reduction <add>, %1, %cst [0] : vector<64x128xf32> to vector<128xf32>
    %3 = vector.shape_cast %2 : vector<128xf32> to vector<1x128xf32>
    %cst_1 = arith.constant 9.99999996E-13 : f32
    %4 = vector.broadcast %cst_1 : f32 to vector<1x128xf32>
    %5 = arith.addf %3, %4 : vector<1x128xf32>
    %6 = math.rsqrt %5 : vector<1x128xf32>
    %7 = vector.broadcast %6 : vector<1x128xf32> to vector<64x128xf32>
    %8 = arith.mulf %0, %7 : vector<64x128xf32>
    %9 = arith.truncf %8 : vector<64x128xf32> to vector<64x128xbf16>
    %c0_2 = arith.constant 0 : index
    %c0_3 = arith.constant 0 : index
    %10 = vector.load %arg2[%c0_2, %c0_3] : memref<64x128xbf16, #tpu.memory_space<vmem>>, vector<64x128xbf16>
    tpu.vector_store %arg2[%c0_2, %c0_3], %9 {strides = array<i32>} : memref<64x128xbf16, #tpu.memory_space<vmem>>, vector<64x128xbf16>,
    return
  }
  func.func @transform_0(%arg0: i32) -> (i32, i32) {
    %c0_i32 = arith.constant 0 : i32
    %c0_i32_0 = arith.constant 0 : i32
    return %c0_i32, %arg0 : i32, i32
  }
  func.func @transform_1(%arg0: i32) -> (i32, i32) {
    %c0_i32 = arith.constant 0 : i32
    %c0_i32_0 = arith.constant 0 : i32
    return %c0_i32, %arg0 : i32, i32
  }
}

</mosaic_0001>

<llo_original>
// kernel: tpu_custom_call.1
$region0: #{tpu_custom_call.1}
  #allocation0 [shape = 'u32[]', space=smem, size = 0x4, offset = 0x4, fixed_abs, tag = 'smem constant byte address 0x4 - core index']
  #allocation1 [shape = 'u32[144,128]{1,0:T(1,128)}', space=vmem, size = 0x12000, scoped, tag = 'internal scratch']
  %s0 = inlined_call_operand.hbm [shape: f32[64,128], index: 0, kind: input, shape index: {}]
  %s1 = inlined_call_operand.hbm [shape: bf16[64,128], index: 1, kind: output, shape index: {}]
  %s2 = sld [smem:[#allocation0]]
  $region18: #{tpu_custom_call.1} parent=0
    _
  %s4 = ssub.s32 1, %s2
  %s5 = scalar_select 0, %s4, %s2
  $region1: #{tpu_custom_call.1} parent=0
    #allocation2 [shape = 'u8[32768]{0}', space=vmem, size = 0x8000, scoped, tag = 'input window, operand 0, single buffered']
    #allocation3 [shape = 's32[1]{0}', space=sflag, size = 0x4, scoped, tag = 'scoped memory for tpu_custom_call.1']
    #allocation4 [shape = 's32[1]{0}', space=sflag, size = 0x4, scoped, tag = 'scoped memory for tpu_custom_call.1']
    #allocation5 [shape = 'u8[16384]{0}', space=vmem, size = 0x4000, scoped, tag = 'output window, operand 0, single buffered']
    %6 = vsyncpa [#allocation3], 0
    %7 = vsyncpa [#allocation4], 0
    // Predicated region
    $region2: #{tpu_custom_call.1} parent=1 // pred_check
      _
    $region3: #{tpu_custom_call.1} parent=1 // pred_check_branch
      %9 = sbr.rel (0) target = $region5
    $region4: #{tpu_custom_call.1} parent=1 // pred_region
      %s11 = ssub.s32 1024, 1024
      %12 = vsyncadd [#allocation3], %s11
      %s13 = sshll.u32 [#allocation2], 4
      %s14 = int_to_ptr.vmem [resolvable:$true] %s13
      %19 = dma.hbm_to_vmem [thread:$0]  %s0, 1024, %s14, [#allocation3], 128, 128, 8
    $region5: #{tpu_custom_call.1} parent=1 // pred_fallthru
      _
    // Predicated region
    $region6: #{tpu_custom_call.1} parent=1 // pred_check
      _
    $region7: #{tpu_custom_call.1} parent=1 // pred_check_branch
      %21 = sbr.rel (0) target = $region9
    $region8: #{tpu_custom_call.1} parent=1 // pred_region
      %22 = dma.done [#allocation3], 1024
    $region9: #{tpu_custom_call.1} parent=1 // pred_fallthru
      _
    %v23 = vld [vmem:[#allocation2] sm:$0xff]
    %v24 = vld [vmem:[#allocation2 + $0x8] sm:$0xff]
    %v25 = vld [vmem:[#allocation2 + $0x10] sm:$0xff]
    %v26 = vld [vmem:[#allocation2 + $0x18] sm:$0xff]
    %v27 = vld [vmem:[#allocation2 + $0x20] sm:$0xff]
    %v28 = vld [vmem:[#allocation2 + $0x28] sm:$0xff]
    %v29 = vld [vmem:[#allocation2 + $0x30] sm:$0xff]
    %v30 = vld [vmem:[#allocation2 + $0x38] sm:$0xff]
    %v31 = vmul.f32 %v23, %v23
    %v32 = vmul.f32 %v24, %v24
    %v33 = vmul.f32 %v25, %v25
    %v34 = vmul.f32 %v26, %v26
    %v35 = vmul.f32 %v27, %v27
    %v36 = vmul.f32 %v28, %v28
    %v37 = vmul.f32 %v29, %v29
    %v38 = vmul.f32 %v30, %v30
    %v39 = vadd.f32 %v31, %v32
    %v40 = vadd.f32 %v39, %v33
    %v41 = vadd.f32 %v40, %v34
    %v42 = vadd.f32 %v41, %v35
    %v43 = vadd.f32 %v42, %v36
    %v44 = vadd.f32 %v43, %v37
    %v45 = vadd.f32 %v44, %v38
    %v46 = vrot.slane %v45, 4
    %v47 = vadd.f32 %v45, %v46
    %v48 = vrot.slane %v47, 2
    %v49 = vadd.f32 %v47, %v48
    %v50 = vrot.slane %v49, 1
    %v51 = vadd.f32 %v49, %v50
    %v52 = vadd.f32 %v51, 1e-12
    %v53 = vrsqrt.pop %v52
    %v54 = vmul.f32 %v23, %v53
    %v55 = vmul.f32 %v24, %v53
    %v56 = vmul.f32 %v25, %v53
    %v57 = vmul.f32 %v26, %v53
    %v58 = vmul.f32 %v27, %v53
    %v59 = vmul.f32 %v28, %v53
    %v60 = vmul.f32 %v29, %v53
    %v61 = vmul.f32 %v30, %v53
    %v62 = vpack.c.bf16 %v55, %v54
    %v63 = vpack.c.bf16 %v57, %v56
    %v64 = vpack.c.bf16 %v59, %v58
    %v65 = vpack.c.bf16 %v61, %v60
    %v70 = vunpack.c.l.b16 %v62
    %v71 = vunpack.c.h.b16 %v62
    %v72 = vunpack.c.l.b16 %v63
    %v73 = vunpack.c.h.b16 %v63
    %v74 = vunpack.c.l.b16 %v64
    %v75 = vunpack.c.h.b16 %v64
    %v76 = vunpack.c.l.b16 %v65
    %v77 = vunpack.c.h.b16 %v65
    %v78 = vpack.c.b16 %v70, %v70
    %v79 = vpack.c.b16 %v71, %v71
    %v80 = vpack.c.b16 %v72, %v72
    %v81 = vpack.c.b16 %v73, %v73
    %v82 = vpack.c.b16 %v74, %v74
    %v83 = vpack.c.b16 %v75, %v75
    %v84 = vpack.c.b16 %v76, %v76
    %v85 = vpack.c.b16 %v77, %v77
    %94 = vst [vmem:[#allocation5] sm:$0xf] %v78
    %95 = vst [vmem:[#allocation5 + $0x4] sm:$0xf] %v79
    %96 = vst [vmem:[#allocation5 + $0x8] sm:$0xf] %v80
    %97 = vst [vmem:[#allocation5 + $0xc] sm:$0xf] %v81
    %98 = vst [vmem:[#allocation5 + $0x10] sm:$0xf] %v82
    %99 = vst [vmem:[#allocation5 + $0x14] sm:$0xf] %v83
    %100 = vst [vmem:[#allocation5 + $0x18] sm:$0xf] %v84
    %101 = vst [vmem:[#allocation5 + $0x1c] sm:$0xf] %v85
    // Predicated region
    $region10: #{tpu_custom_call.1} parent=1 // pred_check
      _
    $region11: #{tpu_custom_call.1} parent=1 // pred_check_branch
      %103 = sbr.rel (0) target = $region13
    $region12: #{tpu_custom_call.1} parent=1 // pred_region
      %s105 = ssub.s32 512, 512
      %106 = vsyncadd [#allocation4], %s105
      %s107 = sshll.u32 [#allocation5], 4
      %s108 = int_to_ptr.vmem [resolvable:$true] %s107
      %113 = dma.vmem_to_hbm [thread:$0]  %s108, 512, %s1, [#allocation4], 64, 64, 4
    $region13: #{tpu_custom_call.1} parent=1 // pred_fallthru
      _
    // Predicated region
    $region14: #{tpu_custom_call.1} parent=1 // pred_check
      _
    $region15: #{tpu_custom_call.1} parent=1 // pred_check_branch
      %115 = sbr.rel (0) target = $region17
    $region16: #{tpu_custom_call.1} parent=1 // pred_region
      %116 = dma.done [#allocation4], 512
    $region17: #{tpu_custom_call.1} parent=1 // pred_fallthru
      _
    %117 = vsyncpa [#allocation3], 1
    %118 = vsyncpa [#allocation4], 1

</llo_original>
